<compile_context>
chip_gen: v7x
topology: tpu7x:2x2x1
jax: 0.10.0
libtpu: 0.0.40
codegen_flags: <defaults>
</compile_context>

<pallas_src>
import jax
import jax.numpy as jnp
from jax.experimental import pallas as pl
from jax.experimental.pallas import tpu as pltpu


def _round_up(x, m):
    return ((x + m - 1) // m) * m


def _choose_tiling(B, cap=4096):
    """Pick (TB, B_pad, n_steps): TB multiple of 128, >=2 steps when enough work."""
    B128 = _round_up(B, 128)
    if B128 <= 128:
        TB = B128                                    # single tile
    else:
        TB = min(cap, _round_up((B128 + 1) // 2, 128))
    B_pad = _round_up(B128, TB)
    return TB, B_pad, B_pad // TB


def youtube_dnn_kernel(uid_ref, iid_ref, u_tbl_ref, i_tbl_ref,
                       w1_ref, b1_ref, w2_ref, b2_ref, out_ref):
    """Transposed orientation: features on sublanes, batch on lanes."""
    TB = uid_ref.shape[1]

    def gather_T(tbl_ref, ids):
        # tbl_ref: (D, n) bf16 VMEM-resident, ids: (1, TB) int32 -> (D, TB) f32.
        # One-hot MXU gather; each output element sums exactly one bf16 value,
        # so the gathered values are exact.
        n = tbl_ref.shape[1]
        rows = jax.lax.broadcasted_iota(jnp.int32, (n, TB), 0)
        onehot = jnp.where(rows == ids, 1.0, 0.0).astype(jnp.bfloat16)     # (n, TB)
        return jnp.dot(tbl_ref[...], onehot, preferred_element_type=jnp.float32)

    u = gather_T(u_tbl_ref, uid_ref[...])                                  # (D, TB) f32
    i = gather_T(i_tbl_ref, iid_ref[...])                                  # (D, TB) f32

    # user tower: Linear -> ReLU -> Dropout (identity at eval) -> Linear
    # TODO(synk): training-mode dropout is not modeled (identity in eval mode).
    h = jnp.dot(w1_ref[...], u.astype(jnp.bfloat16),
                preferred_element_type=jnp.float32)                        # (H1, TB)
    h = jnp.maximum(h + b1_ref[...], 0.0)                                  # bias + ReLU, f32
    u2 = jnp.dot(w2_ref[...], h.astype(jnp.bfloat16),
                 preferred_element_type=jnp.float32)                       # (D, TB)
    u2 = u2 + b2_ref[...]

    # Per-example dot product: sublane reduce over D -> lane-dense (1, TB) store.
    out_ref[...] = jnp.sum(u2 * i, axis=0, keepdims=True)


def prepare_params(params, *, max_gather_rows=4096):
    """One-time parameter prep (cast/transpose/pad) hoisted out of the hot path."""
    user_emb, item_emb = params["user_emb"], params["item_emb"]
    n_users, D = user_emb.shape
    n_items = item_emb.shape[0]
    H1 = params["w1"].shape[0]

    n_u_pad = _round_up(n_users, 16)
    n_i_pad = _round_up(n_items, 16)
    if max(n_u_pad, n_i_pad) > max_gather_rows:
        # TODO(synk): large-table path (ids via scalar prefetch + per-row DMA gather
        # from HBM tables in memory_space=pl.ANY) is not implemented; tables must fit
        # comfortably in VMEM for the one-hot gather used here.
        raise NotImplementedError("embedding tables too large for VMEM-resident gather")

    u_tbl = jnp.pad(user_emb.astype(jnp.bfloat16).T, ((0, 0), (0, n_u_pad - n_users)))
    i_tbl = jnp.pad(item_emb.astype(jnp.bfloat16).T, ((0, 0), (0, n_i_pad - n_items)))
    return dict(
        u_tbl=u_tbl,                                           # (D, n_u_pad) bf16
        i_tbl=i_tbl,                                           # (D, n_i_pad) bf16
        w1=params["w1"].astype(jnp.bfloat16),                  # (H1, D) bf16
        b1=params["b1"].astype(jnp.float32).reshape(H1, 1),    # (H1, 1) f32
        w2=params["w2"].astype(jnp.bfloat16),                  # (D, H1) bf16
        b2=params["b2"].astype(jnp.float32).reshape(D, 1),     # (D, 1) f32
    )


def youtube_dnn_forward(user_ids, item_ids, prep, *, tile_cap=4096):
    """Hot path: only the int32 ids are streamed; everything else is VMEM-resident."""
    B = user_ids.shape[0]
    TB, B_pad, n_steps = _choose_tiling(B, tile_cap)

    uid = jnp.pad(user_ids.astype(jnp.int32), (0, B_pad - B)).reshape(1, B_pad)
    iid = jnp.pad(item_ids.astype(jnp.int32), (0, B_pad - B)).reshape(1, B_pad)

    u_tbl, i_tbl = prep["u_tbl"], prep["i_tbl"]
    w1, b1, w2, b2 = prep["w1"], prep["b1"], prep["w2"], prep["b2"]
    D = u_tbl.shape[0]
    H1 = w1.shape[0]
    n_u_pad, n_i_pad = u_tbl.shape[1], i_tbl.shape[1]

    flops = 2 * B_pad * D * (n_u_pad + n_i_pad + 2 * H1) + 6 * B_pad * max(D, H1)
    bytes_accessed = (3 * B_pad * 4                                   # id streams + output
                      + 2 * (u_tbl.size + i_tbl.size + w1.size + w2.size)
                      + 4 * (b1.size + b2.size))

    out = pl.pallas_call(
        youtube_dnn_kernel,
        out_shape=jax.ShapeDtypeStruct((1, B_pad), jnp.float32),
        grid=(n_steps,),
        in_specs=[
            pl.BlockSpec((1, TB), lambda i: (0, i)),                  # user ids (streamed)
            pl.BlockSpec((1, TB), lambda i: (0, i)),                  # item ids (streamed)
            pl.BlockSpec(u_tbl.shape, lambda i: (0, 0)),              # user table (resident)
            pl.BlockSpec(i_tbl.shape, lambda i: (0, 0)),              # item table (resident)
            pl.BlockSpec(w1.shape, lambda i: (0, 0)),                 # W1 (resident)
            pl.BlockSpec(b1.shape, lambda i: (0, 0)),                 # b1 (resident)
            pl.BlockSpec(w2.shape, lambda i: (0, 0)),                 # W2 (resident)
            pl.BlockSpec(b2.shape, lambda i: (0, 0)),                 # b2 (resident)
        ],
        out_specs=pl.BlockSpec((1, TB), lambda i: (0, i)),            # lane-dense output row
        compiler_params=pltpu.CompilerParams(
            dimension_semantics=("parallel",),                        # shard batch across TCs
            vmem_limit_bytes=32 * 1024 * 1024,
        ),
        cost_estimate=pl.CostEstimate(
            flops=flops, transcendentals=0, bytes_accessed=bytes_accessed),
    )(uid, iid, u_tbl, i_tbl, w1, b1, w2, b2)

    return out[0, :B]                                                  # (B,)


def init_params(key, n_users, n_items, embedding_dim, hidden_units, dataset_normalized=True):
    """Deterministic synthetic parameters in the PyTorch module's layout (f32 master)."""
    D = embedding_dim
    H1 = hidden_units[0]
    assert hidden_units[-1] == D, "last user tower layer must match embedding_dim"
    k = jax.random.split(key, 6)
    if dataset_normalized:
        lo, hi = -1.0 / D, 1.0 / D
    else:
        lo, hi = 0.0, 10.0 / D
    user_emb = jax.random.uniform(k[0], (n_users, D), jnp.float32, lo, hi)
    item_emb = jax.random.uniform(k[1], (n_items, D), jnp.float32, lo, hi)
    # nn.Linear default init: U(-1/sqrt(fan_in), 1/sqrt(fan_in)); weight shape (out, in).
    lim1 = 1.0 / jnp.sqrt(D)
    lim2 = 1.0 / jnp.sqrt(H1)
    w1 = jax.random.uniform(k[2], (H1, D), jnp.float32, -lim1, lim1)
    b1 = jax.random.uniform(k[3], (H1,), jnp.float32, -lim1, lim1)
    w2 = jax.random.uniform(k[4], (D, H1), jnp.float32, -lim2, lim2)
    b2 = jax.random.uniform(k[5], (D,), jnp.float32, -lim2, lim2)
    return dict(user_emb=user_emb, item_emb=item_emb, w1=w1, b1=b1, w2=w2, b2=b2)


def reference_forward(user_ids, item_ids, params):
    """Pure-JAX reference mirroring the kernel's bf16 quantization points."""
    u = params["user_emb"][user_ids].astype(jnp.bfloat16)
    i = params["item_emb"][item_ids].astype(jnp.bfloat16)
    w1 = params["w1"].astype(jnp.bfloat16)          # (H1, D)
    w2 = params["w2"].astype(jnp.bfloat16)          # (D, H1)
    h = jnp.dot(u, w1.T, preferred_element_type=jnp.float32) + params["b1"].astype(jnp.float32)
    h = jnp.maximum(h, 0.0)
    u2 = (jnp.dot(h.astype(jnp.bfloat16), w2.T, preferred_element_type=jnp.float32)
          + params["b2"].astype(jnp.float32))
    return jnp.sum(u2 * i.astype(jnp.float32), axis=1)


if __name__ == "__main__":
    # Small config: embedding_dim=32, user_hidden_units=[64, 32]
    n_users, n_items = 16, 24
    embedding_dim = 32
    hidden_units = [64, 32]

    key = jax.random.PRNGKey(0)
    pkey, ukey, ikey = jax.random.split(key, 3)
    params = init_params(pkey, n_users, n_items, embedding_dim, hidden_units,
                         dataset_normalized=True)
    prep = prepare_params(params)        # one-time cast / transpose / pad

    # Case 1: small batch, single-tile grid (TB = 128, grid = (1,)).
    batch = 8
    user_ids = jax.random.randint(ukey, (batch,), 0, n_users)
    item_ids = jax.random.randint(ikey, (batch,), 0, n_items)
    out = jax.block_until_ready(youtube_dnn_forward(user_ids, item_ids, prep))
    ref = reference_forward(user_ids, item_ids, params)
    assert out.shape == (batch,)
    assert jnp.allclose(out, ref, atol=1e-4, rtol=1e-3), (out, ref)

    # Case 2: batch > 128 exercises the multi-step pipelined grid (TB=384, grid=(2,)).
    batch2 = 600
    ukey2, ikey2 = jax.random.split(jax.random.PRNGKey(1))
    user_ids2 = jax.random.randint(ukey2, (batch2,), 0, n_users)
    item_ids2 = jax.random.randint(ikey2, (batch2,), 0, n_items)
    out2 = jax.block_until_ready(youtube_dnn_forward(user_ids2, item_ids2, prep))
    ref2 = reference_forward(user_ids2, item_ids2, params)
    assert out2.shape == (batch2,)
    assert jnp.allclose(out2, ref2, atol=1e-4, rtol=1e-3), (out2, ref2)

    print("KERNEL_OK")
</pallas_src>

<mosaic_0001>
module attributes {stable_mosaic.version = 11 : i64} {
  func.func @youtube_dnn_kernel(%arg0: i32, %arg1: memref<1x128xi32, #tpu.memory_space<vmem>>, %arg2: memref<1x128xi32, #tpu.memory_space<vmem>>, %arg3: memref<32x16xbf16, #tpu.memory_space<vmem>>, %arg4: memref<32x32xbf16, #tpu.memory_space<vmem>>, %arg5: memref<64x32xbf16, #tpu.memory_space<vmem>>, %arg6: memref<64x1xf32, #tpu.memory_space<vmem>>, %arg7: memref<32x64xbf16, #tpu.memory_space<vmem>>, %arg8: memref<32x1xf32, #tpu.memory_space<vmem>>, %arg9: memref<1x128xf32, #tpu.memory_space<vmem>>) attributes {dimension_semantics = [#tpu.dimension_semantics<parallel>], iteration_bounds = array<i64: 1>, scalar_prefetch = 0 : i64, scratch_operands = 0 : i64, tpu.core_type = #tpu.core_type<tc>, window_params = [{transform_indices = @transform_0, window_bounds = array<i64: 1, 128>}, {transform_indices = @transform_1, window_bounds = array<i64: 1, 128>}, {pipeline_mode = #tpu.pipeline_mode<synchronous>, transform_indices = @transform_2, window_bounds = array<i64: 32, 16>}, {pipeline_mode = #tpu.pipeline_mode<synchronous>, transform_indices = @transform_3, window_bounds = array<i64: 32, 32>}, {pipeline_mode = #tpu.pipeline_mode<synchronous>, transform_indices = @transform_4, window_bounds = array<i64: 64, 32>}, {pipeline_mode = #tpu.pipeline_mode<synchronous>, transform_indices = @transform_5, window_bounds = array<i64: 64, 1>}, {pipeline_mode = #tpu.pipeline_mode<synchronous>, transform_indices = @transform_6, window_bounds = array<i64: 32, 64>}, {pipeline_mode = #tpu.pipeline_mode<synchronous>, transform_indices = @transform_7, window_bounds = array<i64: 32, 1>}, {transform_indices = @transform_8, window_bounds = array<i64: 1, 128>}]} {
    %c0 = arith.constant 0 : index
    %c0_0 = arith.constant 0 : index
    %0 = vector.load %arg1[%c0, %c0_0] : memref<1x128xi32, #tpu.memory_space<vmem>>, vector<1x128xi32>
    %1 = tpu.iota {dimensions = array<i32: 0>} : vector<16x128xi32>
    %2 = vector.broadcast %0 : vector<1x128xi32> to vector<16x128xi32>
    %3 = arith.cmpi eq, %1, %2 : vector<16x128xi32>
    %cst = arith.constant 1.000000e+00 : f32
    %cst_1 = arith.constant 0.000000e+00 : f32
    %4 = vector.broadcast %cst : f32 to vector<16x128xf32>
    %5 = vector.broadcast %cst_1 : f32 to vector<16x128xf32>
    %6 = arith.select %3, %4, %5 : vector<16x128xi1>, vector<16x128xf32>
    %7 = arith.truncf %6 : vector<16x128xf32> to vector<16x128xbf16>
    %c0_2 = arith.constant 0 : index
    %c0_3 = arith.constant 0 : index
    %8 = vector.load %arg3[%c0_2, %c0_3] : memref<32x16xbf16, #tpu.memory_space<vmem>>, vector<32x16xbf16>
    %cst_4 = arith.constant dense<0.000000e+00> : vector<32x128xf32>
    %9 = tpu.matmul %8, %7, %cst_4 {dimension_numbers = #tpu.dot_dimension_numbers<[1], [0], [0], [1], [0, 0, 1, 1], [], []>} : vector<32x16xbf16>, vector<16x128xbf16>, vector<32x128xf32> -> vector<32x128xf32>
    %c0_5 = arith.constant 0 : index
    %c0_6 = arith.constant 0 : index
    %10 = vector.load %arg2[%c0_5, %c0_6] : memref<1x128xi32, #tpu.memory_space<vmem>>, vector<1x128xi32>
    %11 = tpu.iota {dimensions = array<i32: 0>} : vector<32x128xi32>
    %12 = vector.broadcast %10 : vector<1x128xi32> to vector<32x128xi32>
    %13 = arith.cmpi eq, %11, %12 : vector<32x128xi32>
    %cst_7 = arith.constant 1.000000e+00 : f32
    %cst_8 = arith.constant 0.000000e+00 : f32
    %14 = vector.broadcast %cst_7 : f32 to vector<32x128xf32>
    %15 = vector.broadcast %cst_8 : f32 to vector<32x128xf32>
    %16 = arith.select %13, %14, %15 : vector<32x128xi1>, vector<32x128xf32>
    %17 = arith.truncf %16 : vector<32x128xf32> to vector<32x128xbf16>
    %c0_9 = arith.constant 0 : index
    %c0_10 = arith.constant 0 : index
    %18 = vector.load %arg4[%c0_9, %c0_10] : memref<32x32xbf16, #tpu.memory_space<vmem>>, vector<32x32xbf16>
    %cst_11 = arith.constant dense<0.000000e+00> : vector<32x128xf32>
    %19 = tpu.matmul %18, %17, %cst_11 {dimension_numbers = #tpu.dot_dimension_numbers<[1], [0], [0], [1], [0, 0, 1, 1], [], []>} : vector<32x32xbf16>, vector<32x128xbf16>, vector<32x128xf32> -> vector<32x128xf32>
    %c0_12 = arith.constant 0 : index
    %c0_13 = arith.constant 0 : index
    %20 = vector.load %arg5[%c0_12, %c0_13] : memref<64x32xbf16, #tpu.memory_space<vmem>>, vector<64x32xbf16>
    %21 = arith.truncf %9 : vector<32x128xf32> to vector<32x128xbf16>
    %cst_14 = arith.constant dense<0.000000e+00> : vector<64x128xf32>
    %22 = tpu.matmul %20, %21, %cst_14 {dimension_numbers = #tpu.dot_dimension_numbers<[1], [0], [0], [1], [0, 0, 1, 1], [], []>} : vector<64x32xbf16>, vector<32x128xbf16>, vector<64x128xf32> -> vector<64x128xf32>
    %c0_15 = arith.constant 0 : index
    %c0_16 = arith.constant 0 : index
    %23 = vector.load %arg6[%c0_15, %c0_16] : memref<64x1xf32, #tpu.memory_space<vmem>>, vector<64x1xf32>
    %24 = vector.broadcast %23 : vector<64x1xf32> to vector<64x128xf32>
    %25 = arith.addf %22, %24 : vector<64x128xf32>
    %cst_17 = arith.constant 0.000000e+00 : f32
    %26 = vector.broadcast %cst_17 : f32 to vector<64x128xf32>
    %27 = arith.maximumf %25, %26 : vector<64x128xf32>
    %c0_18 = arith.constant 0 : index
    %c0_19 = arith.constant 0 : index
    %28 = vector.load %arg7[%c0_18, %c0_19] : memref<32x64xbf16, #tpu.memory_space<vmem>>, vector<32x64xbf16>
    %29 = arith.truncf %27 : vector<64x128xf32> to vector<64x128xbf16>
    %cst_20 = arith.constant dense<0.000000e+00> : vector<32x128xf32>
    %30 = tpu.matmul %28, %29, %cst_20 {dimension_numbers = #tpu.dot_dimension_numbers<[1], [0], [0], [1], [0, 0, 1, 1], [], []>} : vector<32x64xbf16>, vector<64x128xbf16>, vector<32x128xf32> -> vector<32x128xf32>
    %c0_21 = arith.constant 0 : index
    %c0_22 = arith.constant 0 : index
    %31 = vector.load %arg8[%c0_21, %c0_22] : memref<32x1xf32, #tpu.memory_space<vmem>>, vector<32x1xf32>
    %32 = vector.broadcast %31 : vector<32x1xf32> to vector<32x128xf32>
    %33 = arith.addf %30, %32 : vector<32x128xf32>
    %34 = arith.mulf %33, %19 : vector<32x128xf32>
    %cst_23 = arith.constant dense<0.000000e+00> : vector<128xf32>
    %35 = vector.multi_reduction <add>, %34, %cst_23 [0] : vector<32x128xf32> to vector<128xf32>
    %36 = vector.shape_cast %35 : vector<128xf32> to vector<1x128xf32>
    %c0_24 = arith.constant 0 : index
    %c0_25 = arith.constant 0 : index
    %37 = vector.load %arg9[%c0_24, %c0_25] : memref<1x128xf32, #tpu.memory_space<vmem>>, vector<1x128xf32>
    tpu.vector_store %arg9[%c0_24, %c0_25], %36 {strides = array<i32>} : memref<1x128xf32, #tpu.memory_space<vmem>>, vector<1x128xf32>,
    return
  }
  func.func @transform_0(%arg0: i32) -> (i32, i32) {
    %c0_i32 = arith.constant 0 : i32
    %c0_i32_0 = arith.constant 0 : i32
    return %c0_i32, %arg0 : i32, i32
  }
  func.func @transform_1(%arg0: i32) -> (i32, i32) {
    %c0_i32 = arith.constant 0 : i32
    %c0_i32_0 = arith.constant 0 : i32
    return %c0_i32, %arg0 : i32, i32
  }
  func.func @transform_2(%arg0: i32) -> (i32, i32) {
    %c0_i32 = arith.constant 0 : i32
    %c0_i32_0 = arith.constant 0 : i32
    %c0_i32_1 = arith.constant 0 : i32
    return %c0_i32, %c0_i32_0 : i32, i32
  }
  func.func @transform_3(%arg0: i32) -> (i32, i32) {
    %c0_i32 = arith.constant 0 : i32
    %c0_i32_0 = arith.constant 0 : i32
    %c0_i32_1 = arith.constant 0 : i32
    return %c0_i32, %c0_i32_0 : i32, i32
  }
  func.func @transform_4(%arg0: i32) -> (i32, i32) {
    %c0_i32 = arith.constant 0 : i32
    %c0_i32_0 = arith.constant 0 : i32
    %c0_i32_1 = arith.constant 0 : i32
    return %c0_i32, %c0_i32_0 : i32, i32
  }
  func.func @transform_5(%arg0: i32) -> (i32, i32) {
    %c0_i32 = arith.constant 0 : i32
    %c0_i32_0 = arith.constant 0 : i32
    %c0_i32_1 = arith.constant 0 : i32
    return %c0_i32, %c0_i32_0 : i32, i32
  }
  func.func @transform_6(%arg0: i32) -> (i32, i32) {
    %c0_i32 = arith.constant 0 : i32
    %c0_i32_0 = arith.constant 0 : i32
    %c0_i32_1 = arith.constant 0 : i32
    return %c0_i32, %c0_i32_0 : i32, i32
  }
  func.func @transform_7(%arg0: i32) -> (i32, i32) {
    %c0_i32 = arith.constant 0 : i32
    %c0_i32_0 = arith.constant 0 : i32
    %c0_i32_1 = arith.constant 0 : i32
    return %c0_i32, %c0_i32_0 : i32, i32
  }
  func.func @transform_8(%arg0: i32) -> (i32, i32) {
    %c0_i32 = arith.constant 0 : i32
    %c0_i32_0 = arith.constant 0 : i32
    return %c0_i32, %arg0 : i32, i32
  }
}

</mosaic_0001>

<llo_original>
// kernel: tpu_custom_call.1
$region0: #{tpu_custom_call.1}
  #allocation0 [shape = 'u32[]', space=smem, size = 0x4, offset = 0x4, fixed_abs, tag = 'smem constant byte address 0x4 - core index']
  #allocation1 [shape = 'u32[144,128]{1,0:T(1,128)}', space=vmem, size = 0x12000, scoped, tag = 'internal scratch']
  %s0 = inlined_call_operand.vmem [shape: s32[1,128], index: 0, kind: input, shape index: {}]
  %s1 = inlined_call_operand.vmem [shape: s32[1,128], index: 1, kind: input, shape index: {}]
  %s2 = inlined_call_operand.vmem [shape: bf16[32,16], index: 2, kind: input, shape index: {}]
  %s3 = inlined_call_operand.vmem [shape: bf16[32,32], index: 3, kind: input, shape index: {}]
  %s4 = inlined_call_operand.vmem [shape: bf16[64,32], index: 4, kind: input, shape index: {}]
  %s5 = inlined_call_operand.vmem [shape: f32[64,1], index: 5, kind: input, shape index: {}]
  %s6 = inlined_call_operand.vmem [shape: bf16[32,64], index: 6, kind: input, shape index: {}]
  %s7 = inlined_call_operand.vmem [shape: f32[32,1], index: 7, kind: input, shape index: {}]
  %s8 = inlined_call_operand.hbm [shape: f32[1,128], index: 8, kind: output, shape index: {}]
  %s9 = sld [smem:[#allocation0]]
  $region42: #{tpu_custom_call.1} parent=0
    _
  %s11 = ssub.s32 1, %s9
  %s12 = scalar_select 0, %s11, %s9
  $region1: #{tpu_custom_call.1} parent=0
    #allocation2 [shape = 'u8[512]{0}', space=vmem, size = 0x400, scoped, tag = 'output window, operand 0, single buffered']
    #allocation3 [shape = 's32[1]{0}', space=sflag, size = 0x4, scoped, tag = 'scoped memory for tpu_custom_call.1']
    %13 = vsyncpa [#allocation3], 0
    // Predicated region
    $region2: #{tpu_custom_call.1} parent=1 // pred_check
      _
    $region3: #{tpu_custom_call.1} parent=1 // pred_check_branch
      %15 = sbr.rel (0) target = $region5
    $region4: #{tpu_custom_call.1} parent=1 // pred_region
      _
    $region5: #{tpu_custom_call.1} parent=1 // pred_fallthru
      _
    // Predicated region
    $region6: #{tpu_custom_call.1} parent=1 // pred_check
      _
    $region7: #{tpu_custom_call.1} parent=1 // pred_check_branch
      %17 = sbr.rel (0) target = $region9
    $region8: #{tpu_custom_call.1} parent=1 // pred_region
      _
    $region9: #{tpu_custom_call.1} parent=1 // pred_fallthru
      _
    // Predicated region
    $region10: #{tpu_custom_call.1} parent=1 // pred_check
      _
    $region11: #{tpu_custom_call.1} parent=1 // pred_check_branch
      %19 = sbr.rel (0) target = $region13
    $region12: #{tpu_custom_call.1} parent=1 // pred_region
      _
    $region13: #{tpu_custom_call.1} parent=1 // pred_fallthru
      _
    // Predicated region
    $region14: #{tpu_custom_call.1} parent=1 // pred_check
      _
    $region15: #{tpu_custom_call.1} parent=1 // pred_check_branch
      %21 = sbr.rel (0) target = $region17
    $region16: #{tpu_custom_call.1} parent=1 // pred_region
      _
    $region17: #{tpu_custom_call.1} parent=1 // pred_fallthru
      _
    // Predicated region
    $region18: #{tpu_custom_call.1} parent=1 // pred_check
      _
    $region19: #{tpu_custom_call.1} parent=1 // pred_check_branch
      %23 = sbr.rel (0) target = $region21
    $region20: #{tpu_custom_call.1} parent=1 // pred_region
      _
    $region21: #{tpu_custom_call.1} parent=1 // pred_fallthru
      _
    // Predicated region
    $region22: #{tpu_custom_call.1} parent=1 // pred_check
      _
    $region23: #{tpu_custom_call.1} parent=1 // pred_check_branch
      %25 = sbr.rel (0) target = $region25
    $region24: #{tpu_custom_call.1} parent=1 // pred_region
      _
    $region25: #{tpu_custom_call.1} parent=1 // pred_fallthru
      _
    // Predicated region
    $region26: #{tpu_custom_call.1} parent=1 // pred_check
      _
    $region27: #{tpu_custom_call.1} parent=1 // pred_check_branch
      %27 = sbr.rel (0) target = $region29
    $region28: #{tpu_custom_call.1} parent=1 // pred_region
      _
    $region29: #{tpu_custom_call.1} parent=1 // pred_fallthru
      _
    // Predicated region
    $region30: #{tpu_custom_call.1} parent=1 // pred_check
      _
    $region31: #{tpu_custom_call.1} parent=1 // pred_check_branch
      %29 = sbr.rel (0) target = $region33
    $region32: #{tpu_custom_call.1} parent=1 // pred_region
      _
    $region33: #{tpu_custom_call.1} parent=1 // pred_fallthru
      _
    %v31 = vld [vmem:[%s0] sm:$0x1]
    %v32 = vlaneseq
    %v33 = vshrl.u32 %v32, 7
    %v34 = vadd.s32 %v33, 8
    %v35 = vlaneseq
    %v36 = vshrl.u32 %v35, 7
    %v37 = vsub.s32 0, %v36
    %v38 = vrot.slane %v31, %v37
    %vm39 = vcmp.eq.s32.totalorder %v33, %v38
    %vm40 = vcmp.eq.s32.totalorder %v34, %v38
    %v41 = vsel %vm39, 1.0, 0.0
    %v42 = vsel %vm40, 1.0, 0.0
    %v43 = vpack.c.bf16 %v42, %v41
    %v44 = vld [vmem:[%s2] sm:$0xf]
    %v45 = vld [vmem:[%s2 + $0x4] sm:$0xf]
    %v46 = vld [vmem:[%s2 + $0x8] sm:$0xf]
    %v47 = vld [vmem:[%s2 + $0xc] sm:$0xf]
    %v52 = vunpack.c.l.b16 %v44
    %v53 = vunpack.c.l.b16 %v45
    %v54 = vunpack.c.l.b16 %v46
    %v55 = vunpack.c.l.b16 %v47
    %v56 = vpack.c.b16 %v53, %v52
    %v57 = vpack.c.b16 %v55, %v54
    %vm58 = vcmask 130048
    %v60 = vsel %vm58, %v56, 0
    %v63 = vsel %vm58, %v57, 0
    %65 = vmatprep.subr.bf16.mxu0 0
    %66 = vmatpush1.bf16.msra.mxu0 %v43
    %67 = vmatprep.subr.bf16.mxu0 0
    %68 = vmatpush1.bf16.msra.mxu0 0
    %69 = vmatprep.subr.bf16.mxu0 0
    %70 = vmatpush1.bf16.msra.mxu0 0
    %71 = vmatprep.subr.bf16.mxu0 0
    %72 = vmatpush1.bf16.msra.mxu0 0
    %73 = vmatprep.subr.bf16.mxu0 0
    %74 = vmatpush1.bf16.msra.mxu0 0
    %75 = vmatprep.subr.bf16.mxu0 0
    %76 = vmatpush1.bf16.msra.mxu0 0
    %77 = vmatprep.subr.bf16.mxu0 0
    %78 = vmatpush1.bf16.msra.mxu0 0
    %79 = vmatprep.subr.bf16.mxu0 0
    %80 = vmatpush1.bf16.msra.mxu0 0
    %81 = vmatprep.subr.bf16.mxu0 0
    %82 = vmatpush1.bf16.msra.mxu0 0
    %83 = vmatprep.subr.bf16.mxu0 0
    %84 = vmatpush1.bf16.msra.mxu0 0
    %85 = vmatprep.subr.bf16.mxu0 0
    %86 = vmatpush1.bf16.msra.mxu0 0
    %87 = vmatprep.subr.bf16.mxu0 0
    %88 = vmatpush1.bf16.msra.mxu0 0
    %89 = vmatprep.subr.bf16.mxu0 0
    %90 = vmatpush1.bf16.msra.mxu0 0
    %91 = vmatprep.subr.bf16.mxu0 0
    %92 = vmatpush1.bf16.msra.mxu0 0
    %93 = vmatprep.subr.bf16.mxu0 0
    %94 = vmatpush1.bf16.msra.mxu0 0
    %95 = vmatprep.subr.bf16.mxu0 0
    %96 = vmatpush1.bf16.msra.mxu0 0
    %97 = vmatprep.mubr.bf16.mxu0 0
    %98 = vmatmul.mubr.bf16.gmra.mrb[0].mxu0 %v60
    %v99 = vpop.f32.mrb[0].mxu0
    %v100 = vadd.f32 0.0, %v99
    %v101 = vpop.f32.mrb[0].mxu0
    %v102 = vpop.f32.mrb[0].mxu0
    %v103 = vadd.f32 0.0, %v102
    %v104 = vpop.f32.mrb[0].mxu0
    %105 = vmatprep.mubr.bf16.mxu0 0
    %106 = vmatmul.mubr.bf16.gmra.mrb[0].mxu0 %v63
    %v107 = vpop.f32.mrb[0].mxu0
    %v108 = vadd.f32 0.0, %v107
    %v109 = vpop.f32.mrb[0].mxu0
    %v110 = vpop.f32.mrb[0].mxu0
    %v111 = vadd.f32 0.0, %v110
    %v112 = vpop.f32.mrb[0].mxu0
    %113 = vdwg.mxu0
    %v114 = vld [vmem:[%s1] sm:$0x1]
    %v115 = vadd.s32 %v33, 16
    %v116 = vadd.s32 %v33, 24
    %v117 = vlaneseq
    %v118 = vshrl.u32 %v117, 7
    %v119 = vsub.s32 0, %v118
    %v120 = vrot.slane %v114, %v119
    %vm121 = vcmp.eq.s32.totalorder %v33, %v120
    %vm122 = vcmp.eq.s32.totalorder %v34, %v120
    %vm123 = vcmp.eq.s32.totalorder %v115, %v120
    %vm124 = vcmp.eq.s32.totalorder %v116, %v120
    %v125 = vsel %vm121, 1.0, 0.0
    %v126 = vsel %vm122, 1.0, 0.0
    %v127 = vsel %vm123, 1.0, 0.0
    %v128 = vsel %vm124, 1.0, 0.0
    %v129 = vpack.c.bf16 %v126, %v125
    %v130 = vpack.c.bf16 %v128, %v127
    %v131 = vld [vmem:[%s3] sm:$0xf]
    %v132 = vld [vmem:[%s3 + $0x4] sm:$0xf]
    %v133 = vld [vmem:[%s3 + $0x8] sm:$0xf]
    %v134 = vld [vmem:[%s3 + $0xc] sm:$0xf]
    %v139 = vunpack.c.l.b16 %v131
    %v140 = vunpack.c.l.b16 %v132
    %v141 = vunpack.c.l.b16 %v133
    %v142 = vunpack.c.l.b16 %v134
    %v143 = vpack.c.b16 %v140, %v139
    %v144 = vpack.c.b16 %v142, %v141
    %vm145 = vcmask 261120
    %v147 = vsel %vm145, %v143, 0
    %v150 = vsel %vm145, %v144, 0
    %152 = vmatprep.subr.bf16.mxu0 0
    %153 = vmatpush1.bf16.msra.mxu0 %v129
    %154 = vmatprep.subr.bf16.mxu0 0
    %155 = vmatpush1.bf16.msra.mxu0 %v130
    %156 = vmatprep.subr.bf16.mxu0 0
    %157 = vmatpush1.bf16.msra.mxu0 0
    %158 = vmatprep.subr.bf16.mxu0 0
    %159 = vmatpush1.bf16.msra.mxu0 0
    %160 = vmatprep.subr.bf16.mxu0 0
    %161 = vmatpush1.bf16.msra.mxu0 0
    %162 = vmatprep.subr.bf16.mxu0 0
    %163 = vmatpush1.bf16.msra.mxu0 0
    %164 = vmatprep.subr.bf16.mxu0 0
    %165 = vmatpush1.bf16.msra.mxu0 0
    %166 = vmatprep.subr.bf16.mxu0 0
    %167 = vmatpush1.bf16.msra.mxu0 0
    %168 = vmatprep.subr.bf16.mxu0 0
    %169 = vmatpush1.bf16.msra.mxu0 0
    %170 = vmatprep.subr.bf16.mxu0 0
    %171 = vmatpush1.bf16.msra.mxu0 0
    %172 = vmatprep.subr.bf16.mxu0 0
    %173 = vmatpush1.bf16.msra.mxu0 0
    %174 = vmatprep.subr.bf16.mxu0 0
    %175 = vmatpush1.bf16.msra.mxu0 0
    %176 = vmatprep.subr.bf16.mxu0 0
    %177 = vmatpush1.bf16.msra.mxu0 0
    %178 = vmatprep.subr.bf16.mxu0 0
    %179 = vmatpush1.bf16.msra.mxu0 0
    %180 = vmatprep.subr.bf16.mxu0 0
    %181 = vmatpush1.bf16.msra.mxu0 0
    %182 = vmatprep.subr.bf16.mxu0 0
    %183 = vmatpush1.bf16.msra.mxu0 0
    %184 = vmatprep.mubr.bf16.mxu0 0
    %185 = vmatmul.mubr.bf16.gmra.mrb[0].mxu0 %v147
    %v186 = vpop.f32.mrb[0].mxu0
    %v187 = vadd.f32 0.0, %v186
    %v188 = vpop.f32.mrb[0].mxu0
    %v189 = vpop.f32.mrb[0].mxu0
    %v190 = vadd.f32 0.0, %v189
    %v191 = vpop.f32.mrb[0].mxu0
    %192 = vmatprep.mubr.bf16.mxu0 0
    %193 = vmatmul.mubr.bf16.gmra.mrb[0].mxu0 %v150
    %v194 = vpop.f32.mrb[0].mxu0
    %v195 = vadd.f32 0.0, %v194
    %v196 = vpop.f32.mrb[0].mxu0
    %v197 = vpop.f32.mrb[0].mxu0
    %v198 = vadd.f32 0.0, %v197
    %v199 = vpop.f32.mrb[0].mxu0
    %200 = vdwg.mxu0
    %v201 = vld [vmem:[%s4] sm:$0xf]
    %v202 = vld [vmem:[%s4 + $0x4] sm:$0xf]
    %v203 = vld [vmem:[%s4 + $0x8] sm:$0xf]
    %v204 = vld [vmem:[%s4 + $0xc] sm:$0xf]
    %v205 = vld [vmem:[%s4 + $0x10] sm:$0xf]
    %v206 = vld [vmem:[%s4 + $0x14] sm:$0xf]
    %v207 = vld [vmem:[%s4 + $0x18] sm:$0xf]
    %v208 = vld [vmem:[%s4 + $0x1c] sm:$0xf]
    %v209 = vpack.c.bf16 %v103, %v100
    %v210 = vpack.c.bf16 %v111, %v108
    %v211 = vld [vmem:[%s5] sm:$0xff]
    %v212 = vld [vmem:[%s5 + $0x8] sm:$0xff]
    %v213 = vld [vmem:[%s5 + $0x10] sm:$0xff]
    %v214 = vld [vmem:[%s5 + $0x18] sm:$0xff]
    %v215 = vld [vmem:[%s5 + $0x20] sm:$0xff]
    %v216 = vld [vmem:[%s5 + $0x28] sm:$0xff]
    %v217 = vld [vmem:[%s5 + $0x30] sm:$0xff]
    %v218 = vld [vmem:[%s5 + $0x38] sm:$0xff]
    %220 = vset.pattern.permute.xlu0 0
    %221 = vperm.xlu0 %220, %v211
    %v222 = vpop.permute.xlu0 %221
    %225 = vset.pattern.permute.xlu0 0
    %226 = vperm.xlu0 %225, %v212
    %v227 = vpop.permute.xlu0 %226
    %230 = vset.pattern.permute.xlu0 0
    %231 = vperm.xlu0 %230, %v213
    %v232 = vpop.permute.xlu0 %231
    %235 = vset.pattern.permute.xlu0 0
    %236 = vperm.xlu0 %235, %v214
    %v237 = vpop.permute.xlu0 %236
    %240 = vset.pattern.permute.xlu0 0
    %241 = vperm.xlu0 %240, %v215
    %v242 = vpop.permute.xlu0 %241
    %245 = vset.pattern.permute.xlu0 0
    %246 = vperm.xlu0 %245, %v216
    %v247 = vpop.permute.xlu0 %246
    %250 = vset.pattern.permute.xlu0 0
    %251 = vperm.xlu0 %250, %v217
    %v252 = vpop.permute.xlu0 %251
    %255 = vset.pattern.permute.xlu0 0
    %256 = vperm.xlu0 %255, %v218
    %v257 = vpop.permute.xlu0 %256
    %v267 = vunpack.c.l.b16 %v201
    %v268 = vunpack.c.l.b16 %v202
    %v269 = vunpack.c.l.b16 %v203
    %v270 = vunpack.c.l.b16 %v204
    %v271 = vunpack.c.l.b16 %v205
    %v272 = vunpack.c.l.b16 %v206
    %v273 = vunpack.c.l.b16 %v207
    %v274 = vunpack.c.l.b16 %v208
    %v275 = vpack.c.b16 %v268, %v267
    %v276 = vpack.c.b16 %v270, %v269
    %v277 = vpack.c.b16 %v272, %v271
    %v278 = vpack.c.b16 %v274, %v273
    %v280 = vsel %vm145, %v275, 0
    %v283 = vsel %vm145, %v276, 0
    %v286 = vsel %vm145, %v277, 0
    %v289 = vsel %vm145, %v278, 0
    %291 = vmatprep.subr.bf16.mxu0 0
    %292 = vmatpush1.bf16.msra.mxu0 %v209
    %293 = vmatprep.subr.bf16.mxu0 0
    %294 = vmatpush1.bf16.msra.mxu0 %v210
    %295 = vmatprep.subr.bf16.mxu0 0
    %296 = vmatpush1.bf16.msra.mxu0 0
    %297 = vmatprep.subr.bf16.mxu0 0
    %298 = vmatpush1.bf16.msra.mxu0 0
    %299 = vmatprep.subr.bf16.mxu0 0
    %300 = vmatpush1.bf16.msra.mxu0 0
    %301 = vmatprep.subr.bf16.mxu0 0
    %302 = vmatpush1.bf16.msra.mxu0 0
    %303 = vmatprep.subr.bf16.mxu0 0
    %304 = vmatpush1.bf16.msra.mxu0 0
    %305 = vmatprep.subr.bf16.mxu0 0
    %306 = vmatpush1.bf16.msra.mxu0 0
    %307 = vmatprep.subr.bf16.mxu0 0
    %308 = vmatpush1.bf16.msra.mxu0 0
    %309 = vmatprep.subr.bf16.mxu0 0
    %310 = vmatpush1.bf16.msra.mxu0 0
    %311 = vmatprep.subr.bf16.mxu0 0
    %312 = vmatpush1.bf16.msra.mxu0 0
    %313 = vmatprep.subr.bf16.mxu0 0
    %314 = vmatpush1.bf16.msra.mxu0 0
    %315 = vmatprep.subr.bf16.mxu0 0
    %316 = vmatpush1.bf16.msra.mxu0 0
    %317 = vmatprep.subr.bf16.mxu0 0
    %318 = vmatpush1.bf16.msra.mxu0 0
    %319 = vmatprep.subr.bf16.mxu0 0
    %320 = vmatpush1.bf16.msra.mxu0 0
    %321 = vmatprep.subr.bf16.mxu0 0
    %322 = vmatpush1.bf16.msra.mxu0 0
    %323 = vmatprep.mubr.bf16.mxu0 0
    %324 = vmatmul.mubr.bf16.gmra.mrb[0].mxu0 %v280
    %v325 = vpop.f32.mrb[0].mxu0
    %v326 = vadd.f32 %v222, %v325
    %v327 = vpop.f32.mrb[0].mxu0
    %v328 = vpop.f32.mrb[0].mxu0
    %v329 = vadd.f32 %v227, %v328
    %v330 = vpop.f32.mrb[0].mxu0
    %331 = vmatprep.mubr.bf16.mxu0 0
    %332 = vmatmul.mubr.bf16.gmra.mrb[0].mxu0 %v283
    %v333 = vpop.f32.mrb[0].mxu0
    %v334 = vadd.f32 %v232, %v333
    %v335 = vpop.f32.mrb[0].mxu0
    %v336 = vpop.f32.mrb[0].mxu0
    %v337 = vadd.f32 %v237, %v336
    %v338 = vpop.f32.mrb[0].mxu0
    %339 = vmatprep.mubr.bf16.mxu0 0
    %340 = vmatmul.mubr.bf16.gmra.mrb[0].mxu0 %v286
    %v341 = vpop.f32.mrb[0].mxu0
    %v342 = vadd.f32 %v242, %v341
    %v343 = vpop.f32.mrb[0].mxu0
    %v344 = vpop.f32.mrb[0].mxu0
    %v345 = vadd.f32 %v247, %v344
    %v346 = vpop.f32.mrb[0].mxu0
    %347 = vmatprep.mubr.bf16.mxu0 0
    %348 = vmatmul.mubr.bf16.gmra.mrb[0].mxu0 %v289
    %v349 = vpop.f32.mrb[0].mxu0
    %v350 = vadd.f32 %v252, %v349
    %v351 = vpop.f32.mrb[0].mxu0
    %v352 = vpop.f32.mrb[0].mxu0
    %v353 = vadd.f32 %v257, %v352
    %v354 = vpop.f32.mrb[0].mxu0
    %355 = vdwg.mxu0
    %v356 = vmax.f32 %v326, 0.0
    %v357 = vmax.f32 %v329, 0.0
    %v358 = vmax.f32 %v334, 0.0
    %v359 = vmax.f32 %v337, 0.0
    %v360 = vmax.f32 %v342, 0.0
    %v361 = vmax.f32 %v345, 0.0
    %v362 = vmax.f32 %v350, 0.0
    %v363 = vmax.f32 %v353, 0.0
    %v364 = vld [vmem:[%s6] sm:$0xf]
    %v365 = vld [vmem:[%s6 + $0x4] sm:$0xf]
    %v366 = vld [vmem:[%s6 + $0x8] sm:$0xf]
    %v367 = vld [vmem:[%s6 + $0xc] sm:$0xf]
    %v368 = vpack.c.bf16 %v357, %v356
    %v369 = vpack.c.bf16 %v359, %v358
    %v370 = vpack.c.bf16 %v361, %v360
    %v371 = vpack.c.bf16 %v363, %v362
    %v372 = vld [vmem:[%s7] sm:$0xff]
    %v373 = vld [vmem:[%s7 + $0x8] sm:$0xff]
    %v374 = vld [vmem:[%s7 + $0x10] sm:$0xff]
    %v375 = vld [vmem:[%s7 + $0x18] sm:$0xff]
    %377 = vset.pattern.permute.xlu0 0
    %378 = vperm.xlu0 %377, %v372
    %v379 = vpop.permute.xlu0 %378
    %382 = vset.pattern.permute.xlu0 0
    %383 = vperm.xlu0 %382, %v373
    %v384 = vpop.permute.xlu0 %383
    %387 = vset.pattern.permute.xlu0 0
    %388 = vperm.xlu0 %387, %v374
    %v389 = vpop.permute.xlu0 %388
    %392 = vset.pattern.permute.xlu0 0
    %393 = vperm.xlu0 %392, %v375
    %v394 = vpop.permute.xlu0 %393
    %v400 = vunpack.c.l.b16 %v364
    %v401 = vunpack.c.l.b16 %v365
    %v402 = vunpack.c.l.b16 %v366
    %v403 = vunpack.c.l.b16 %v367
    %v404 = vpack.c.b16 %v401, %v400
    %v405 = vpack.c.b16 %v403, %v402
    %vm406 = vcmask 523264
    %v408 = vsel %vm406, %v404, 0
    %v411 = vsel %vm406, %v405, 0
    %413 = vmatprep.subr.bf16.mxu0 0
    %414 = vmatpush1.bf16.msra.mxu0 %v368
    %415 = vmatprep.subr.bf16.mxu0 0
    %416 = vmatpush1.bf16.msra.mxu0 %v369
    %417 = vmatprep.subr.bf16.mxu0 0
    %418 = vmatpush1.bf16.msra.mxu0 %v370
    %419 = vmatprep.subr.bf16.mxu0 0
    %420 = vmatpush1.bf16.msra.mxu0 %v371
    %421 = vmatprep.subr.bf16.mxu0 0
    %422 = vmatpush1.bf16.msra.mxu0 0
    %423 = vmatprep.subr.bf16.mxu0 0
    %424 = vmatpush1.bf16.msra.mxu0 0
    %425 = vmatprep.subr.bf16.mxu0 0
    %426 = vmatpush1.bf16.msra.mxu0 0
    %427 = vmatprep.subr.bf16.mxu0 0
    %428 = vmatpush1.bf16.msra.mxu0 0
    %429 = vmatprep.subr.bf16.mxu0 0
    %430 = vmatpush1.bf16.msra.mxu0 0
    %431 = vmatprep.subr.bf16.mxu0 0
    %432 = vmatpush1.bf16.msra.mxu0 0
    %433 = vmatprep.subr.bf16.mxu0 0
    %434 = vmatpush1.bf16.msra.mxu0 0
    %435 = vmatprep.subr.bf16.mxu0 0
    %436 = vmatpush1.bf16.msra.mxu0 0
    %437 = vmatprep.subr.bf16.mxu0 0
    %438 = vmatpush1.bf16.msra.mxu0 0
    %439 = vmatprep.subr.bf16.mxu0 0
    %440 = vmatpush1.bf16.msra.mxu0 0
    %441 = vmatprep.subr.bf16.mxu0 0
    %442 = vmatpush1.bf16.msra.mxu0 0
    %443 = vmatprep.subr.bf16.mxu0 0
    %444 = vmatpush1.bf16.msra.mxu0 0
    %445 = vmatprep.mubr.bf16.mxu0 0
    %446 = vmatmul.mubr.bf16.gmra.mrb[0].mxu0 %v408
    %v447 = vpop.f32.mrb[0].mxu0
    %v448 = vadd.f32 %v379, %v447
    %v449 = vpop.f32.mrb[0].mxu0
    %v450 = vpop.f32.mrb[0].mxu0
    %v451 = vadd.f32 %v384, %v450
    %v452 = vpop.f32.mrb[0].mxu0
    %453 = vmatprep.mubr.bf16.mxu0 0
    %454 = vmatmul.mubr.bf16.gmra.mrb[0].mxu0 %v411
    %v455 = vpop.f32.mrb[0].mxu0
    %v456 = vadd.f32 %v389, %v455
    %v457 = vpop.f32.mrb[0].mxu0
    %v458 = vpop.f32.mrb[0].mxu0
    %v459 = vadd.f32 %v394, %v458
    %v460 = vpop.f32.mrb[0].mxu0
    %461 = vdwg.mxu0
    %v462 = vmul.f32 %v448, %v187
    %v463 = vmul.f32 %v451, %v190
    %v464 = vmul.f32 %v456, %v195
    %v465 = vmul.f32 %v459, %v198
    %v466 = vadd.f32 %v462, %v463
    %v467 = vadd.f32 %v466, %v464
    %v468 = vadd.f32 %v467, %v465
    %v469 = vrot.slane %v468, 4
    %v470 = vadd.f32 %v468, %v469
    %v471 = vrot.slane %v470, 2
    %v472 = vadd.f32 %v470, %v471
    %v473 = vrot.slane %v472, 1
    %v474 = vadd.f32 %v472, %v473
    %475 = vst [vmem:[#allocation2] sm:$0x1] %v474
    // Predicated region
    $region34: #{tpu_custom_call.1} parent=1 // pred_check
      _
    $region35: #{tpu_custom_call.1} parent=1 // pred_check_branch
      %477 = sbr.rel (0) target = $region37
    $region36: #{tpu_custom_call.1} parent=1 // pred_region
      %s479 = ssub.s32 16, 16
      %480 = vsyncadd [#allocation3], %s479
      %s482 = sshll.u32 [#allocation2], 4
      %s483 = int_to_ptr.vmem [resolvable:$true] %s482
      %485 = dma.vmem_to_hbm [thread:$0]  %s483, 16, %s8, [#allocation3]
    $region37: #{tpu_custom_call.1} parent=1 // pred_fallthru
      _
    // Predicated region
    $region38: #{tpu_custom_call.1} parent=1 // pred_check
      _
    $region39: #{tpu_custom_call.1} parent=1 // pred_check_branch
      %487 = sbr.rel (0) target = $region41
    $region40: #{tpu_custom_call.1} parent=1 // pred_region
      %488 = dma.done [#allocation3], 16
    $region41: #{tpu_custom_call.1} parent=1 // pred_fallthru
      _
    %489 = vsyncpa [#allocation3], 1

</llo_original>
